<compile_context>
chip_gen: v7x
topology: tpu7x:2x2x1
jax: 0.10.0
libtpu: 0.0.40
codegen_flags: <defaults>
</compile_context>

<pallas_src>
import jax
import jax.numpy as jnp
from jax.experimental import pallas as pl
from jax.experimental.pallas import tpu as pltpu

GAMMA = 2  # integer gamma -> explicit square inside the kernel
IGNORE_INDEX = -100


def _focal_loss_kernel(logits_ref, target_ref, sum_ref):
    # logits_ref: [TILE_N, C] (source dtype), target_ref: [TILE_N, 1] int32.
    x = logits_ref[...].astype(jnp.float32)                        # [T, C] in-register cast
    t = target_ref[...]                                            # [T, 1]

    # Pass 1: row max + gather of the target-class logit on the raw logits
    # (compare + select + add; no one-hot cast, no shifted-z temporary).
    col = jax.lax.broadcasted_iota(jnp.int32, x.shape, 1)          # [T, C]
    is_t = col == t                                                # [T, C] bool
    m = jnp.max(x, axis=1, keepdims=True)                          # [T, 1]
    x_t = jnp.sum(jnp.where(is_t, x, 0.0), axis=1, keepdims=True)  # [T, 1]

    # Pass 2: numerically-stable logsumexp (only full-tile EUP op).
    lse = jnp.log(jnp.sum(jnp.exp(x - m), axis=1, keepdims=True))  # [T, 1]

    # Focal modulation only on the gathered [T, 1] column (gamma == 2).
    log_pt_t = (x_t - m) - lse                                      # [T, 1]
    pt_t = jnp.exp(log_pt_t)
    omp = 1.0 - pt_t
    focal = omp * omp * log_pt_t

    # ignore_index masking: ignored / padded rows contribute nothing.
    valid = (t != IGNORE_INDEX).astype(jnp.float32)                 # [T, 1]
    per_sample = -focal * valid

    # Per-tile partial sum (independent per grid step -> "parallel" axis).
    sum_ref[0, 0] = jnp.sum(per_sample)


def _round_up(x: int, m: int) -> int:
    return ((x + m - 1) // m) * m


def _min_sublane(itemsize: int) -> int:
    # Minimum second-to-last tile dim per dtype packing: f32 -> 8, bf16 -> 16,
    # int8/fp8 -> 32 sublanes per vreg row-group.
    return {4: 8, 2: 16, 1: 32}.get(itemsize, 8)


def _vmem_budget():
    """Returns (per-tile working budget bytes, vmem_limit_bytes), generation aware."""
    try:
        cap = int(pltpu.get_tpu_info().vmem_capacity_bytes)
    except Exception:
        cap = 64 * 1024 * 1024  # conservative default (v7x per-TC VMEM)
    if cap >= 100 * 1024 * 1024:
        # v5e / v6e: 128 MiB physical VMEM -> large tiles, high scoped limit.
        return 24 * 1024 * 1024, 96 * 1024 * 1024
    # v7x: 64 MiB per TC -> stay conservative.
    return 12 * 1024 * 1024, 48 * 1024 * 1024


def _choose_tile_n(n: int, c: int, itemsize: int, budget_bytes: int) -> int:
    sub = _min_sublane(itemsize)
    c_pad = _round_up(c, 128)  # lane padding of the class axis
    # Real per-row VMEM cost:
    #   2 * c_pad * itemsize      double-buffered logits tile
    #   2 * 128 * 4               double-buffered target tile (int32, lane-padded)
    #   3 * c_pad * 4             in-kernel f32 temporaries (cast copy, exp(x-m), iota/mask)
    bytes_per_row = 2 * c_pad * itemsize + 2 * 128 * 4 + 3 * c_pad * 4
    max_rows = max(sub, budget_bytes // bytes_per_row)
    tile = min(2048, max_rows, _round_up(n, sub))

    # Prefer >= ~8 grid steps (v7x 2-TC sharding + pipeline prefetch depth),
    # but never shrink below 128 rows (or below the budget-limited tile).
    target_steps = 8
    if n >= target_steps * sub:
        steps_tile = _round_up(-(-n // target_steps), sub)
        tile = min(tile, max(steps_tile, min(128, tile)))

    return max(sub, (tile // sub) * sub)


def focal_loss(logits: jax.Array, target: jax.Array) -> jax.Array:
    """logits: [N, C] float (any dtype), target: [N] int -> scalar f32 mean loss.

    Matches PyTorch FocalLoss(gamma=2, weight=None, reduction='mean',
    ignore_index=-100).  Non-ignored out-of-range targets are undefined
    behavior (PyTorch would raise).  All-ignored batch yields NaN (matches
    PyTorch nll_loss 'mean').
    """
    n, c = logits.shape
    itemsize = jnp.dtype(logits.dtype).itemsize
    budget, vmem_limit = _vmem_budget()
    tile_n = _choose_tile_n(n, c, itemsize, budget)
    num_tiles = pl.cdiv(n, tile_n)
    n_pad = num_tiles * tile_n

    target_col = target.astype(jnp.int32).reshape(n, 1)
    if n_pad != n:
        # Padded rows get ignore_index -> valid mask zeroes them out.
        logits_p = jnp.pad(logits, ((0, n_pad - n), (0, 0)))
        target_p = jnp.pad(target_col, ((0, n_pad - n), (0, 0)),
                           constant_values=IGNORE_INDEX)
    else:
        logits_p = logits
        target_p = target_col

    # 3-deep pipelining on the logits stream when tiles are small and the grid
    # is long enough: hides DMA-issue latency behind short per-tile compute.
    c_pad = _round_up(c, 128)
    logits_tile_bytes = tile_n * c_pad * itemsize
    if num_tiles >= 3 and logits_tile_bytes <= budget // 6:
        logits_spec = pl.BlockSpec((tile_n, c), lambda i: (i, 0),
                                   pipeline_mode=pl.Buffered(3))
    else:
        logits_spec = pl.BlockSpec((tile_n, c), lambda i: (i, 0))

    # TODO(synk): for vocab-scale C (tile budget per row exceeded even at the
    # minimum sublane tile), add an inner C-chunk loop with an online
    # logsumexp instead of loading the full [TILE_N, C] row block.

    partials = pl.pallas_call(
        _focal_loss_kernel,
        out_shape=jax.ShapeDtypeStruct((num_tiles, 1), jnp.float32),
        grid_spec=pltpu.PrefetchScalarGridSpec(
            num_scalar_prefetch=0,
            grid=(num_tiles,),
            in_specs=[
                logits_spec,
                pl.BlockSpec((tile_n, 1), lambda i: (i, 0)),
            ],
            out_specs=pl.BlockSpec((1, 1), lambda i: (i, 0),
                                   memory_space=pltpu.SMEM),
        ),
        compiler_params=pltpu.CompilerParams(
            dimension_semantics=("parallel",),
            vmem_limit_bytes=vmem_limit,
        ),
    )(logits_p, target_p)

    loss_sum = jnp.sum(partials)
    # reduction='mean' with weight=None: divide by number of non-ignored rows.
    # Count in int32 (no f32 precision loss for large N).
    # TODO(synk): per-class weight vector (self.weight) not plumbed; default None.
    valid_cnt = jnp.sum((target != IGNORE_INDEX).astype(jnp.int32))
    return (loss_sum / valid_cnt.astype(jnp.float32)).astype(jnp.float32)


def _focal_loss_ref(logits, target):
    """Plain-JAX reference mirroring the PyTorch module (weight=None, mean)."""
    log_pt = jax.nn.log_softmax(logits.astype(jnp.float32), axis=1)
    pt = jnp.exp(log_pt)
    mod = (1.0 - pt) ** GAMMA * log_pt
    picked = jnp.take_along_axis(
        mod, jnp.clip(target, 0, logits.shape[1] - 1)[:, None], axis=1
    )[:, 0]
    valid = (target != IGNORE_INDEX).astype(jnp.float32)
    return jnp.sum(-picked * valid) / jnp.sum(valid)


if __name__ == "__main__":
    root = jax.random.PRNGKey(0)
    k1, k2, k3, k4, k5, k6 = jax.random.split(root, 6)

    # Small case, single tile.
    N, C = 8, 4
    logits = jax.random.normal(k1, (N, C), dtype=jnp.float32)
    target = jax.random.randint(k2, (N,), 0, C, dtype=jnp.int32)
    target = target.at[3].set(IGNORE_INDEX)   # exercise ignore_index masking
    out = focal_loss(logits, target)
    jax.block_until_ready(out)
    ref = _focal_loss_ref(logits, target)
    assert jnp.allclose(out, ref, rtol=1e-5, atol=1e-5), (out, ref)

    # Larger, non-multiple batch: exercises tiling, padding, multi-step grid
    # (and the Buffered(3) logits stream when it is enabled).
    N2, C2 = 1031, 7
    logits2 = jax.random.normal(k3, (N2, C2), dtype=jnp.float32)
    target2 = jax.random.randint(k4, (N2,), 0, C2, dtype=jnp.int32)
    target2 = target2.at[10].set(IGNORE_INDEX)
    out2 = focal_loss(logits2, target2)
    jax.block_until_ready(out2)
    ref2 = _focal_loss_ref(logits2, target2)
    assert jnp.allclose(out2, ref2, rtol=1e-5, atol=1e-5), (out2, ref2)

    # bf16 input: exercises dtype-aware (16-row) sublane tiling + in-kernel cast.
    N3, C3 = 37, 5
    logits3 = jax.random.normal(k5, (N3, C3), dtype=jnp.float32).astype(jnp.bfloat16)
    target3 = jax.random.randint(k6, (N3,), 0, C3, dtype=jnp.int32)
    target3 = target3.at[0].set(IGNORE_INDEX)
    out3 = focal_loss(logits3, target3)
    jax.block_until_ready(out3)
    ref3 = _focal_loss_ref(logits3, target3)
    assert jnp.allclose(out3, ref3, rtol=1e-5, atol=1e-5), (out3, ref3)

    print("KERNEL_OK")
</pallas_src>

<mosaic_0001>
module attributes {stable_mosaic.version = 11 : i64} {
  func.func @_focal_loss_kernel(%arg0: i32, %arg1: memref<8x4xf32, #tpu.memory_space<vmem>>, %arg2: memref<8x1xi32, #tpu.memory_space<vmem>>, %arg3: memref<1x1xf32, #tpu.memory_space<smem>>) attributes {dimension_semantics = [#tpu.dimension_semantics<parallel>], iteration_bounds = array<i64: 1>, scalar_prefetch = 0 : i64, scratch_operands = 0 : i64, tpu.core_type = #tpu.core_type<tc>, window_params = [{transform_indices = @transform_0, window_bounds = array<i64: 8, 4>}, {transform_indices = @transform_1, window_bounds = array<i64: 8, 1>}, {transform_indices = @transform_2, window_bounds = array<i64: 1, 1>}]} {
    %c0 = arith.constant 0 : index
    %c0_0 = arith.constant 0 : index
    %0 = vector.load %arg1[%c0, %c0_0] : memref<8x4xf32, #tpu.memory_space<vmem>>, vector<8x4xf32>
    %c0_1 = arith.constant 0 : index
    %c0_2 = arith.constant 0 : index
    %1 = vector.load %arg2[%c0_1, %c0_2] : memref<8x1xi32, #tpu.memory_space<vmem>>, vector<8x1xi32>
    %2 = tpu.iota {dimensions = array<i32: 1>} : vector<8x4xi32>
    %3 = vector.broadcast %1 : vector<8x1xi32> to vector<8x4xi32>
    %4 = arith.cmpi eq, %2, %3 : vector<8x4xi32>
    %cst = arith.constant dense<0xFF800000> : vector<8xf32>
    %5 = vector.multi_reduction <maximumf>, %0, %cst [1] : vector<8x4xf32> to vector<8xf32>
    %6 = vector.shape_cast %5 : vector<8xf32> to vector<8x1xf32>
    %cst_3 = arith.constant 0.000000e+00 : f32
    %7 = vector.broadcast %cst_3 : f32 to vector<8x4xf32>
    %8 = arith.select %4, %0, %7 : vector<8x4xi1>, vector<8x4xf32>
    %cst_4 = arith.constant dense<0.000000e+00> : vector<8xf32>
    %9 = vector.multi_reduction <add>, %8, %cst_4 [1] : vector<8x4xf32> to vector<8xf32>
    %10 = vector.shape_cast %9 : vector<8xf32> to vector<8x1xf32>
    %11 = vector.broadcast %6 : vector<8x1xf32> to vector<8x4xf32>
    %12 = arith.subf %0, %11 : vector<8x4xf32>
    %13 = math.exp %12 : vector<8x4xf32>
    %cst_5 = arith.constant dense<0.000000e+00> : vector<8xf32>
    %14 = vector.multi_reduction <add>, %13, %cst_5 [1] : vector<8x4xf32> to vector<8xf32>
    %15 = vector.shape_cast %14 : vector<8xf32> to vector<8x1xf32>
    %16 = math.log %15 : vector<8x1xf32>
    %17 = arith.subf %10, %6 : vector<8x1xf32>
    %18 = arith.subf %17, %16 : vector<8x1xf32>
    %19 = math.exp %18 : vector<8x1xf32>
    %cst_6 = arith.constant 1.000000e+00 : f32
    %20 = vector.broadcast %cst_6 : f32 to vector<8x1xf32>
    %21 = arith.subf %20, %19 : vector<8x1xf32>
    %22 = arith.mulf %21, %21 : vector<8x1xf32>
    %23 = arith.mulf %22, %18 : vector<8x1xf32>
    %c-100_i32 = arith.constant -100 : i32
    %24 = vector.broadcast %c-100_i32 : i32 to vector<8x1xi32>
    %25 = arith.cmpi ne, %1, %24 : vector<8x1xi32>
    %26 = arith.extui %25 : vector<8x1xi1> to vector<8x1xi32>
    %27 = arith.sitofp %26 : vector<8x1xi32> to vector<8x1xf32>
    %cst_7 = arith.constant 0.000000e+00 : f32
    %28 = vector.broadcast %cst_7 : f32 to vector<8x1xf32>
    %29 = arith.subf %28, %23 : vector<8x1xf32>
    %30 = arith.mulf %29, %27 : vector<8x1xf32>
    %31 = vector.shape_cast %30 : vector<8x1xf32> to vector<1x8x1xf32>
    %cst_8 = arith.constant dense<0.000000e+00> : vector<1xf32>
    %32 = vector.multi_reduction <add>, %31, %cst_8 [1, 2] : vector<1x8x1xf32> to vector<1xf32>
    %33 = vector.shape_cast %32 : vector<1xf32> to vector<1x1x1xf32>
    %34 = vector.extract %33[0, 0, 0] : f32 from vector<1x1x1xf32>
    %c0_9 = arith.constant 0 : index
    %c0_10 = arith.constant 0 : index
    %35 = memref.load %arg3[%c0_9, %c0_10] : memref<1x1xf32, #tpu.memory_space<smem>>
    memref.store %34, %arg3[%c0_9, %c0_10] : memref<1x1xf32, #tpu.memory_space<smem>>
    return
  }
  func.func @transform_0(%arg0: i32) -> (i32, i32) {
    %c0_i32 = arith.constant 0 : i32
    %c0_i32_0 = arith.constant 0 : i32
    return %arg0, %c0_i32 : i32, i32
  }
  func.func @transform_1(%arg0: i32) -> (i32, i32) {
    %c0_i32 = arith.constant 0 : i32
    %c0_i32_0 = arith.constant 0 : i32
    return %arg0, %c0_i32 : i32, i32
  }
  func.func @transform_2(%arg0: i32) -> (i32, i32) {
    %c0_i32 = arith.constant 0 : i32
    %c0_i32_0 = arith.constant 0 : i32
    return %arg0, %c0_i32 : i32, i32
  }
}

</mosaic_0001>

<llo_original>
// kernel: tpu_custom_call.1
$region0: #{tpu_custom_call.1}
  #allocation0 [shape = 'u32[]', space=smem, size = 0x4, offset = 0x4, fixed_abs, tag = 'smem constant byte address 0x4 - core index']
  #allocation1 [shape = 'u32[144,128]{1,0:T(1,128)}', space=vmem, size = 0x12000, scoped, tag = 'internal scratch']
  %s0 = inlined_call_operand.vmem [shape: f32[8,4], index: 0, kind: input, shape index: {}]
  %s1 = inlined_call_operand.vmem [shape: s32[8,1], index: 1, kind: input, shape index: {}]
  %s2 = inlined_call_operand.hbm [shape: f32[1,1], index: 2, kind: output, shape index: {}]
  %s3 = sld [smem:[#allocation0]]
  $region18: #{tpu_custom_call.1} parent=0
    _
  %s5 = ssub.s32 1, %s3
  %s6 = scalar_select 0, %s5, %s3
  $region1: #{tpu_custom_call.1} parent=0
    #allocation2 [shape = 'u8[512]{0}', space=smem, size = 0x200, scoped, tag = 'output window, operand 0, single buffered']
    #allocation3 [shape = 's32[1]{0}', space=sflag, size = 0x4, scoped, tag = 'scoped memory for tpu_custom_call.1']
    %7 = vsyncpa [#allocation3], 0
    // Predicated region
    $region2: #{tpu_custom_call.1} parent=1 // pred_check
      _
    $region3: #{tpu_custom_call.1} parent=1 // pred_check_branch
      %9 = sbr.rel (0) target = $region5
    $region4: #{tpu_custom_call.1} parent=1 // pred_region
      _
    $region5: #{tpu_custom_call.1} parent=1 // pred_fallthru
      _
    // Predicated region
    $region6: #{tpu_custom_call.1} parent=1 // pred_check
      _
    $region7: #{tpu_custom_call.1} parent=1 // pred_check_branch
      %11 = sbr.rel (0) target = $region9
    $region8: #{tpu_custom_call.1} parent=1 // pred_region
      _
    $region9: #{tpu_custom_call.1} parent=1 // pred_fallthru
      _
    %v12 = vld [vmem:[%s0] sm:$0xff]
    %v13 = vld [vmem:[%s1] sm:$0xff]
    %v14 = vlaneseq
    %v15 = vand.u32 %v14, 127
    %16 = vset.pattern.permute.xlu0 0
    %17 = vperm.xlu0 %16, %v13
    %v18 = vpop.permute.xlu0 %17
    %vm19 = vcmp.eq.s32.totalorder %v15, %v18
    %vm20 = vcmask 31744
    %v21 = vsel %vm20, %v12, -inf
    %22 = vmax.xlane.f32.xlu0 %v21
    %v23 = vpop.xlane.xlu0 %22
    %v24 = vsel %vm19, %v12, 0.0
    %v25 = vsel %vm20, %v24, 0.0
    %26 = vadd.xlane.f32.xlu0 %v25
    %v27 = vpop.xlane.xlu0 %26
    %v28 = vsub.f32 %v12, %v23
    %v29 = vmul.f32 %v28, 1.442695
    %v30 = vpow.pop %v29
    %v31 = vsel %vm20, %v30, 0.0
    %32 = vadd.xlane.f32.xlu0 %v31
    %v33 = vpop.xlane.xlu0 %32
    %v34 = vlog2.pop %v33
    %v35 = vmul.f32 %v34, 0.6931472
    %v36 = vsub.f32 %v27, %v23
    %v37 = vsub.f32 %v36, %v35
    %v38 = vmul.f32 %v37, 1.442695
    %v39 = vpow.pop %v38
    %v40 = vsub.f32 1.0, %v39
    %v41 = vmul.f32 %v40, %v40
    %v42 = vmul.f32 %v41, %v37
    %vm43 = vcmp.ne.s32.totalorder %v13, 4294967196
    %v44 = vsel %vm43, 1, 0
    %v45 = vcvt.s32.f32 %v44
    %v46 = vsub.f32 0.0, %v42
    %v47 = vmul.f32 %v46, %v45
    %vm48 = vcmask 7168
    %v49 = vsel %vm48, %v47, 0.0
    %50 = vadd.xlane.f32.xlu0 %v49
    %v51 = vpop.xlane.xlu0 %50
    %v52 = vrot.slane %v51, 4
    %v53 = vadd.f32 %v51, %v52
    %v54 = vrot.slane %v53, 2
    %v55 = vadd.f32 %v53, %v54
    %v56 = vrot.slane %v55, 1
    %v57 = vadd.f32 %v55, %v56
    %s58 = vtos %v57
    %s59 = scalar_lea.smem [#allocation2], 0
    %60 = sst [smem:[%s59]] %s58
    // Predicated region
    $region10: #{tpu_custom_call.1} parent=1 // pred_check
      _
    $region11: #{tpu_custom_call.1} parent=1 // pred_check_branch
      %62 = sbr.rel (0) target = $region13
    $region12: #{tpu_custom_call.1} parent=1 // pred_region
      %s64 = ssub.s32 16, 16
      %65 = vsyncadd [#allocation3], %s64
      %68 = dma.smem_to_hbm [#allocation2], 16, %s2, [#allocation3]
    $region13: #{tpu_custom_call.1} parent=1 // pred_fallthru
      _
    // Predicated region
    $region14: #{tpu_custom_call.1} parent=1 // pred_check
      _
    $region15: #{tpu_custom_call.1} parent=1 // pred_check_branch
      %70 = sbr.rel (0) target = $region17
    $region16: #{tpu_custom_call.1} parent=1 // pred_region
      %71 = dma.done [#allocation3], 16
    $region17: #{tpu_custom_call.1} parent=1 // pred_fallthru
      _
    %72 = sfence
    %73 = vsyncpa [#allocation3], 1

</llo_original>
